<compile_context>
chip_gen: v6e
topology: v6e:2x2x1
jax: 0.10.0
libtpu: 0.0.40
codegen_flags: <defaults>
</compile_context>

<pallas_src>
import functools

import jax
import jax.numpy as jnp
from jax.experimental import pallas as pl
from jax.experimental.pallas import tpu as pltpu

LANES = 128
MAX_TILE_ROWS = 8192            # worst-case working set ~33 MiB -> safe on v7x (64 MiB VMEM)
VMEM_LIMIT = 48 * 1024 * 1024   # below v7x physical VMEM, plenty for v5e/v6e


def _round_up(x, m):
    return (x + m - 1) // m * m


def _sublane_multiple(dtype):
    # f32 -> 8, bf16 -> 16, int8/fp8 -> 32 (keeps blocks aligned to packed sublanes).
    itemsize = jnp.dtype(dtype).itemsize
    return max(8, 32 // max(itemsize, 1))


def _triplet_kernel(a_ref, p_ref, n_ref, part_ref, acc_ref, *,
                    tiles_per_slice, tile_rows, rows_valid, apply_mask):
    t = pl.program_id(1)  # reduction ("arbitrary") axis

    @pl.when(t == 0)
    def _init():
        acc_ref[...] = jnp.zeros_like(acc_ref)

    # Stream in native dtype, upcast in-register (VPU work hidden under DMA).
    a = a_ref[...].astype(jnp.float32)
    p = p_ref[...].astype(jnp.float32)
    n = n_ref[...].astype(jnp.float32)

    # Single signed accumulator: |a-p| - |a-n|.
    contrib = jnp.abs(a - p) - jnp.abs(a - n)

    if apply_mask:
        # Ragged last block / redundant clamped block: zero rows past the real data.
        s = pl.program_id(0)
        logical_tile = s * tiles_per_slice + t
        row0 = logical_tile * tile_rows
        local_row = jax.lax.broadcasted_iota(jnp.int32, contrib.shape, 0)
        contrib = jnp.where(row0 + local_row < rows_valid, contrib, 0.0)

    acc_ref[...] += contrib

    @pl.when(t == tiles_per_slice - 1)
    def _finalize():
        # Per-slice partial sum; relu(sum + margin) is applied in the wrapper
        # after combining slices (required for the parallel split to be correct).
        part_ref[...] = jnp.full(part_ref.shape, jnp.sum(acc_ref[...]),
                                 dtype=part_ref.dtype)


def triplet_loss(anchor, positive, negative, *, margin, size_average=True,
                 tile_rows=2048):
    """Scalar triplet loss matching TripletLoss.forward.

    size_average only switches mean vs. sum of `losses`, which is already a
    scalar in the reference, so the returned value is identical either way.
    """
    assert anchor.shape == positive.shape == negative.shape
    n_elems = anchor.size  # static under jit

    sub = max(_sublane_multiple(anchor.dtype),
              _sublane_multiple(positive.dtype),
              _sublane_multiple(negative.dtype))

    # Pad only to a sublane-aligned number of rows (NOT to a multiple of the tile).
    rows = _round_up(max(pl.cdiv(n_elems, LANES), 1), sub)
    tm = min(_round_up(max(int(tile_rows), 1), sub), MAX_TILE_ROWS, rows)

    tiles_total = pl.cdiv(rows, tm)
    num_slices = 2 if tiles_total >= 2 else 1       # v7x: one slice per TensorCore
    tps = pl.cdiv(tiles_total, num_slices)          # tiles per slice

    redundant = num_slices * tps != tiles_total      # clamped duplicate tile exists
    ragged = tiles_total * tm != rows                # last block extends past the array
    needs_mask = redundant or ragged

    def prep(x):
        flat = x.reshape(-1)                         # keep native dtype
        pad = rows * LANES - n_elems
        if pad:
            # Zero padding contributes 0 to |a-p| - |a-n|; at most `sub`*128 elems.
            flat = jnp.pad(flat, (0, pad))
        return flat.reshape(rows, LANES)

    a2, p2, n2 = prep(anchor), prep(positive), prep(negative)

    last_tile = tiles_total - 1
    if redundant:
        def in_map(s, t):
            # Clamp so no block is fully out of bounds; the duplicate block is
            # fully masked in-kernel via its (unclamped) logical row offset.
            return (jnp.minimum(s * tps + t, last_tile), 0)
    else:
        def in_map(s, t):
            return (s * tps + t, 0)

    in_block = pl.BlockSpec((tm, LANES), in_map)
    out_block = pl.BlockSpec((1, 8, LANES), lambda s, t: (s, 0, 0))

    kernel = functools.partial(
        _triplet_kernel, tiles_per_slice=tps, tile_rows=tm, rows_valid=rows,
        apply_mask=needs_mask)

    bytes_per_elem = sum(jnp.dtype(x.dtype).itemsize
                         for x in (anchor, positive, negative))

    partials = pl.pallas_call(
        kernel,
        out_shape=jax.ShapeDtypeStruct((num_slices, 8, LANES), jnp.float32),
        grid_spec=pltpu.PrefetchScalarGridSpec(
            num_scalar_prefetch=0,
            grid=(num_slices, tps),
            in_specs=[in_block, in_block, in_block],
            out_specs=out_block,
            scratch_shapes=[pltpu.VMEM((tm, LANES), jnp.float32)],
        ),
        compiler_params=pltpu.CompilerParams(
            dimension_semantics=("parallel", "arbitrary"),
            vmem_limit_bytes=VMEM_LIMIT,
        ),
        cost_estimate=pl.CostEstimate(
            flops=6 * n_elems,
            transcendentals=0,
            bytes_accessed=n_elems * bytes_per_elem + num_slices * 8 * LANES * 4,
        ),
    )(a2, p2, n2)

    total = jnp.sum(partials[:, 0, 0])
    loss = jnp.maximum(total + jnp.float32(margin), 0.0)
    # size_average: mean vs. sum of a scalar -> identical; returned as-is.
    return loss


if __name__ == "__main__":
    margin = 1.0

    def ref(a, p, n):
        a32, p32, n32 = (x.astype(jnp.float32) for x in (a, p, n))
        dp = jnp.sum(jnp.abs(a32 - p32))
        dn = jnp.sum(jnp.abs(a32 - n32))
        return jnp.maximum(dp - dn + margin, 0.0)

    # 1) Small embedding triplet (batch=2, dim=32) — single (8,128) block.
    k1, k2, k3 = jax.random.split(jax.random.PRNGKey(0), 3)
    shape = (2, 32)
    a = jax.random.normal(k1, shape, jnp.float32)
    p = jax.random.normal(k2, shape, jnp.float32)
    n = jax.random.normal(k3, shape, jnp.float32)
    loss_fn = jax.jit(functools.partial(triplet_loss, margin=margin))
    loss = jax.block_until_ready(loss_fn(a, p, n))
    exp = ref(a, p, n)
    assert loss.shape == (), loss.shape
    assert bool(jnp.isfinite(loss))
    assert bool(jnp.allclose(loss, exp, rtol=1e-4, atol=1e-3)), (loss, exp)

    # 2) Multi-tile, dual-slice reduction grid (rows=256, tm=64 -> grid (2,2), no mask).
    kb = jax.random.split(jax.random.PRNGKey(1), 3)
    big = (8, 4096)
    ab, pb, nb = (jax.random.normal(k, big, jnp.float32) for k in kb)
    loss_big = jax.block_until_ready(
        jax.jit(functools.partial(triplet_loss, margin=margin, tile_rows=64))(ab, pb, nb))
    exp_big = ref(ab, pb, nb)
    assert bool(jnp.allclose(loss_big, exp_big, rtol=1e-3, atol=0.25)), (loss_big, exp_big)

    # 3) bf16 native streaming + ragged last block + redundant clamped block (masking path).
    kc = jax.random.split(jax.random.PRNGKey(2), 3)
    odd = (5, 4096)
    ac, pc, nc = (jax.random.normal(k, odd, jnp.float32).astype(jnp.bfloat16) for k in kc)
    loss_odd = jax.block_until_ready(
        jax.jit(functools.partial(triplet_loss, margin=margin, tile_rows=64))(ac, pc, nc))
    exp_odd = ref(ac, pc, nc)
    assert bool(jnp.allclose(loss_odd, exp_odd, rtol=1e-3, atol=0.25)), (loss_odd, exp_odd)

    print("KERNEL_OK")
</pallas_src>

<mosaic_0001>
module attributes {stable_mosaic.version = 11 : i64} {
  func.func @_triplet_kernel(%arg0: i32, %arg1: i32, %arg2: memref<8x128xf32, #tpu.memory_space<vmem>>, %arg3: memref<8x128xf32, #tpu.memory_space<vmem>>, %arg4: memref<8x128xf32, #tpu.memory_space<vmem>>, %arg5: memref<1x8x128xf32, #tpu.memory_space<vmem>>, %arg6: memref<8x128xf32, #tpu.memory_space<vmem>>) attributes {dimension_semantics = [#tpu.dimension_semantics<parallel>, #tpu.dimension_semantics<arbitrary>], iteration_bounds = array<i64: 1, 1>, scalar_prefetch = 0 : i64, scratch_operands = 1 : i64, tpu.core_type = #tpu.core_type<tc>, window_params = [{transform_indices = @transform_0, window_bounds = array<i64: 8, 128>}, {transform_indices = @transform_1, window_bounds = array<i64: 8, 128>}, {transform_indices = @transform_2, window_bounds = array<i64: 8, 128>}, {transform_indices = @transform_3, window_bounds = array<i64: 1, 8, 128>}]} {
    %c0_i32 = arith.constant 0 : i32
    %0 = arith.cmpi eq, %arg1, %c0_i32 : i32
    %1 = arith.extui %0 : i1 to i32
    %c0_i32_0 = arith.constant 0 : i32
    %2 = arith.cmpi ne, %1, %c0_i32_0 : i32
    scf.if %2 {
      %cst = arith.constant 0.000000e+00 : f32
      %17 = vector.broadcast %cst : f32 to vector<8x128xf32>
      %c0_12 = arith.constant 0 : index
      %c0_13 = arith.constant 0 : index
      %18 = vector.load %arg6[%c0_12, %c0_13] : memref<8x128xf32, #tpu.memory_space<vmem>>, vector<8x128xf32>
      tpu.vector_store %arg6[%c0_12, %c0_13], %17 {strides = array<i32>} : memref<8x128xf32, #tpu.memory_space<vmem>>, vector<8x128xf32>,
    } else {
    }
    %c0 = arith.constant 0 : index
    %c0_1 = arith.constant 0 : index
    %3 = vector.load %arg2[%c0, %c0_1] : memref<8x128xf32, #tpu.memory_space<vmem>>, vector<8x128xf32>
    %c0_2 = arith.constant 0 : index
    %c0_3 = arith.constant 0 : index
    %4 = vector.load %arg3[%c0_2, %c0_3] : memref<8x128xf32, #tpu.memory_space<vmem>>, vector<8x128xf32>
    %c0_4 = arith.constant 0 : index
    %c0_5 = arith.constant 0 : index
    %5 = vector.load %arg4[%c0_4, %c0_5] : memref<8x128xf32, #tpu.memory_space<vmem>>, vector<8x128xf32>
    %6 = arith.subf %3, %4 : vector<8x128xf32>
    %7 = math.absf %6 : vector<8x128xf32>
    %8 = arith.subf %3, %5 : vector<8x128xf32>
    %9 = math.absf %8 : vector<8x128xf32>
    %10 = arith.subf %7, %9 : vector<8x128xf32>
    %c0_6 = arith.constant 0 : index
    %c0_7 = arith.constant 0 : index
    %11 = vector.load %arg6[%c0_6, %c0_7] : memref<8x128xf32, #tpu.memory_space<vmem>>, vector<8x128xf32>
    %12 = arith.addf %11, %10 : vector<8x128xf32>
    %c0_8 = arith.constant 0 : index
    %c0_9 = arith.constant 0 : index
    %13 = vector.load %arg6[%c0_8, %c0_9] : memref<8x128xf32, #tpu.memory_space<vmem>>, vector<8x128xf32>
    tpu.vector_store %arg6[%c0_8, %c0_9], %12 {strides = array<i32>} : memref<8x128xf32, #tpu.memory_space<vmem>>, vector<8x128xf32>,
    %c0_i32_10 = arith.constant 0 : i32
    %14 = arith.cmpi eq, %arg1, %c0_i32_10 : i32
    %15 = arith.extui %14 : i1 to i32
    %c0_i32_11 = arith.constant 0 : i32
    %16 = arith.cmpi ne, %15, %c0_i32_11 : i32
    scf.if %16 {
      %c0_12 = arith.constant 0 : index
      %c0_13 = arith.constant 0 : index
      %17 = vector.load %arg6[%c0_12, %c0_13] : memref<8x128xf32, #tpu.memory_space<vmem>>, vector<8x128xf32>
      %18 = vector.shape_cast %17 : vector<8x128xf32> to vector<1x8x128xf32>
      %cst = arith.constant dense<0.000000e+00> : vector<1xf32>
      %19 = vector.multi_reduction <add>, %18, %cst [1, 2] : vector<1x8x128xf32> to vector<1xf32>
      %20 = vector.shape_cast %19 : vector<1xf32> to vector<1x1x1xf32>
      %21 = vector.extract %20[0, 0, 0] : f32 from vector<1x1x1xf32>
      %22 = vector.broadcast %21 : f32 to vector<1x8x128xf32>
      %c0_14 = arith.constant 0 : index
      %c0_15 = arith.constant 0 : index
      %c0_16 = arith.constant 0 : index
      %23 = vector.load %arg5[%c0_14, %c0_15, %c0_16] : memref<1x8x128xf32, #tpu.memory_space<vmem>>, vector<1x8x128xf32>
      tpu.vector_store %arg5[%c0_14, %c0_15, %c0_16], %22 {strides = array<i32>} : memref<1x8x128xf32, #tpu.memory_space<vmem>>, vector<1x8x128xf32>,
    } else {
    }
    return
  }
  func.func @transform_0(%arg0: i32, %arg1: i32) -> (i32, i32) {
    %c1_i32 = arith.constant 1 : i32
    %0 = arith.muli %arg0, %c1_i32 : i32
    %1 = arith.addi %0, %arg1 : i32
    %c0_i32 = arith.constant 0 : i32
    %c0_i32_0 = arith.constant 0 : i32
    return %1, %c0_i32 : i32, i32
  }
  func.func @transform_1(%arg0: i32, %arg1: i32) -> (i32, i32) {
    %c1_i32 = arith.constant 1 : i32
    %0 = arith.muli %arg0, %c1_i32 : i32
    %1 = arith.addi %0, %arg1 : i32
    %c0_i32 = arith.constant 0 : i32
    %c0_i32_0 = arith.constant 0 : i32
    return %1, %c0_i32 : i32, i32
  }
  func.func @transform_2(%arg0: i32, %arg1: i32) -> (i32, i32) {
    %c1_i32 = arith.constant 1 : i32
    %0 = arith.muli %arg0, %c1_i32 : i32
    %1 = arith.addi %0, %arg1 : i32
    %c0_i32 = arith.constant 0 : i32
    %c0_i32_0 = arith.constant 0 : i32
    return %1, %c0_i32 : i32, i32
  }
  func.func @transform_3(%arg0: i32, %arg1: i32) -> (i32, i32, i32) {
    %c0_i32 = arith.constant 0 : i32
    %c0_i32_0 = arith.constant 0 : i32
    %c0_i32_1 = arith.constant 0 : i32
    return %arg0, %c0_i32, %c0_i32_0 : i32, i32, i32
  }
}

</mosaic_0001>

<llo_original>
// kernel: triplet_loss.1
$region0: #{triplet_loss.1}
  #allocation0 [shape = 'u32[]', space=smem, size = 0x4, offset = 0x4, fixed_abs, tag = 'smem constant byte address 0x4 - core index']
  #allocation1 [shape = 'u32[144,128]{1,0:T(1,128)}', space=vmem, size = 0x12000, scoped, tag = 'internal scratch']
  #allocation2 [shape = 'f32[8,128]{1,0:T(8,128)}', space=vmem, size = 0x1000, scoped, tag = 'scratch operand']
  %s0 = inlined_call_operand.vmem [shape: f32[8,128], index: 0, kind: input, shape index: {}]
  %s1 = inlined_call_operand.vmem [shape: f32[8,128], index: 1, kind: input, shape index: {}]
  %s2 = inlined_call_operand.vmem [shape: f32[8,128], index: 2, kind: input, shape index: {}]
  %s3 = inlined_call_operand.vmem [shape: f32[1,8,128], index: 3, kind: output, shape index: {}]
  %s4 = sld [smem:[#allocation0]]
  $region30: #{triplet_loss.1} parent=0
    _
  %s6 = ssub.s32 1, %s4
  %s7 = scalar_select 0, %s6, %s4
  // Predicated region
  $region2: #{triplet_loss.1} parent=0 // pred_check
    _
  $region3: #{triplet_loss.1} parent=0 // pred_check_branch
    %9 = sbr.rel (0) target = $region5
  $region4: #{triplet_loss.1} parent=0 // pred_region
    %s10 = sadd.s32 0, 0
    %p11 = scmp.lt.s32.totalorder %s10, 0
    %s12 = scalar_select %p11, %s10, 0
    %s13 = smul.addr %s12, 8
    %s14 = scalar_lea.vmem %s0, %s13
    %s15 = sadd.s32 0, 0
  $region5: #{triplet_loss.1} parent=0 // pred_fallthru
    _
  // Predicated region
  $region6: #{triplet_loss.1} parent=0 // pred_check
    _
  $region7: #{triplet_loss.1} parent=0 // pred_check_branch
    %17 = sbr.rel (0) target = $region9
  $region8: #{triplet_loss.1} parent=0 // pred_region
    %s18 = sadd.s32 0, 0
    %p19 = scmp.lt.s32.totalorder %s18, 0
    %s20 = scalar_select %p19, %s18, 0
    %s21 = smul.addr %s20, 8
    %s22 = scalar_lea.vmem %s1, %s21
    %s23 = sadd.s32 0, 0
  $region9: #{triplet_loss.1} parent=0 // pred_fallthru
    _
  // Predicated region
  $region10: #{triplet_loss.1} parent=0 // pred_check
    _
  $region11: #{triplet_loss.1} parent=0 // pred_check_branch
    %25 = sbr.rel (0) target = $region13
  $region12: #{triplet_loss.1} parent=0 // pred_region
    %s26 = sadd.s32 0, 0
    %p27 = scmp.lt.s32.totalorder %s26, 0
    %s28 = scalar_select %p27, %s26, 0
    %s29 = smul.addr %s28, 8
    %s30 = scalar_lea.vmem %s2, %s29
    %s31 = sadd.s32 0, 0
  $region13: #{triplet_loss.1} parent=0 // pred_fallthru
    _
  %s32 = sadd.s32 0, 0
  %p33 = scmp.lt.s32.totalorder %s32, 0
  %s34 = scalar_select %p33, %s32, 0
  %s35 = smul.addr %s34, 8
  %s36 = scalar_lea.vmem %s0, %s35
  %s37 = sadd.s32 0, 0
  %p38 = scmp.lt.s32.totalorder %s37, 0
  %s39 = scalar_select %p38, %s37, 0
  %s40 = smul.addr %s39, 8
  %s41 = scalar_lea.vmem %s1, %s40
  %s42 = sadd.s32 0, 0
  %p43 = scmp.lt.s32.totalorder %s42, 0
  %s44 = scalar_select %p43, %s42, 0
  %s45 = smul.addr %s44, 8
  %s46 = scalar_lea.vmem %s2, %s45
  %s47 = sadd.s32 0, 0
  %p48 = scmp.lt.s32.totalorder %s47, 0
  %s49 = scalar_select %p48, %s47, 0
  %s50 = smul.addr %s49, 8
  %s51 = scalar_lea.vmem %s0, %s50
  %s52 = sadd.s32 0, 0
  %s53 = sadd.s32 0, 0
  %p54 = scmp.lt.s32.totalorder %s53, 0
  %s55 = scalar_select %p54, %s53, 0
  %s56 = smul.addr %s55, 8
  %s57 = scalar_lea.vmem %s1, %s56
  %s58 = sadd.s32 0, 0
  %s59 = sadd.s32 0, 0
  %p60 = scmp.lt.s32.totalorder %s59, 0
  %s61 = scalar_select %p60, %s59, 0
  %s62 = smul.addr %s61, 8
  %s63 = scalar_lea.vmem %s2, %s62
  %s64 = sadd.s32 0, 0
  %p65 = scmp.eq.s32.totalorder 0, 0
  // Predicated region
  $region14: #{triplet_loss.1} parent=0 // pred_check
    %p66 = pneg %p65
  $region15: #{triplet_loss.1} parent=0 // pred_check_branch
    %68 = sbr.rel (%p66) target = $region17
  $region16: #{triplet_loss.1} parent=0 // pred_region
    %69 = vst [vmem:[#allocation2] sm:$0xff] 0.0
  $region17: #{triplet_loss.1} parent=0 // pred_fallthru
    _
  %v70 = vld [vmem:[%s51] sm:$0xff]
  %v71 = vld [vmem:[%s57] sm:$0xff]
  %v72 = vld [vmem:[%s63] sm:$0xff]
  %v73 = vsub.f32 %v70, %v71
  %v74 = vand.u32 2147483647, %v73
  %v75 = vsub.f32 %v70, %v72
  %v76 = vand.u32 2147483647, %v75
  %v77 = vsub.f32 %v74, %v76
  %v78 = vld [vmem:[#allocation2] sm:$0xff]
  %v79 = vadd.f32 %v78, %v77
  %80 = vst [vmem:[#allocation2] sm:$0xff] %v79
  // Predicated region
  $region18: #{triplet_loss.1} parent=0 // pred_check
    %p81 = pneg %p65
  $region19: #{triplet_loss.1} parent=0 // pred_check_branch
    %83 = sbr.rel (%p81) target = $region21
  $region20: #{triplet_loss.1} parent=0 // pred_region
    %v84 = vld [vmem:[#allocation2] sm:$0xff]
    %85 = vadd.xlane.f32.xlu0 %v84
    %v86 = vpop.xlane.xlu0 %85
    %v87 = vrot.slane %v86, 4
    %v88 = vadd.f32 %v86, %v87
    %v89 = vrot.slane %v88, 2
    %v90 = vadd.f32 %v88, %v89
    %v91 = vrot.slane %v90, 1
    %v92 = vadd.f32 %v90, %v91
    %s93 = vtos %v92
    %v94 = vstv %s93
    %95 = vst [vmem:[%s3] sm:$0xff] %v94
  $region21: #{triplet_loss.1} parent=0 // pred_fallthru
    _
  // Predicated region
  $region22: #{triplet_loss.1} parent=0 // pred_check
    _
  $region23: #{triplet_loss.1} parent=0 // pred_check_branch
    %97 = sbr.rel (0) target = $region25
  $region24: #{triplet_loss.1} parent=0 // pred_region
    _
  $region25: #{triplet_loss.1} parent=0 // pred_fallthru
    _
  // Predicated region
  $region26: #{triplet_loss.1} parent=0 // pred_check
    _
  $region27: #{triplet_loss.1} parent=0 // pred_check_branch
    %99 = sbr.rel (0) target = $region29
  $region28: #{triplet_loss.1} parent=0 // pred_region
    _
  $region29: #{triplet_loss.1} parent=0 // pred_fallthru
    _

</llo_original>
